<compile_context>
chip_gen: v7x
topology: tpu7x:2x2x1
jax: 0.10.0
libtpu: 0.0.40
codegen_flags: <defaults>
</compile_context>

<pallas_src>
import functools

import jax
import jax.numpy as jnp
from jax.experimental import pallas as pl
from jax.experimental.pallas import tpu as pltpu


# ------------------------- per-head fused MHA kernel -------------------------
def _mha_head_kernel(x_ref, wqkv_ref, wproj_ref, bproj_ref, o_ref, acc_ref,
                     *, head_size, approx_recip):
    # grid = (num_batch_blocks, num_heads); head axis accumulates into acc_ref.
    # x_ref     : (Bb, T, C)      batch-row block (same block across the head axis)
    # wqkv_ref  : (1, C, 3*HS)    this head's [q | k | v] projection columns
    # wproj_ref : (1, HS, C)      this head's rows of the output projection
    # bproj_ref : (1, C)          output-projection bias (f32)
    # o_ref     : (Bb, T, C)      lane-dense output block
    # acc_ref   : (Bb, T, C) f32  output accumulator across the head axis
    HS = head_size
    h = pl.program_id(1)
    nh = pl.num_programs(1)
    cdt = wqkv_ref.dtype                      # MXU operand dtype (f32 or bf16)

    @pl.when(h == 0)
    def _init():
        acc_ref[...] = jnp.broadcast_to(
            bproj_ref[...].astype(jnp.float32), acc_ref.shape)

    x = x_ref[...]
    Bb, T, C = x.shape

    # --- this head's fused QKV projection: one (C, 3*HS) matmul, f32 accum ---
    x2 = x.reshape(Bb * T, C).astype(cdt)
    qkv = jnp.dot(x2, wqkv_ref[0],
                  preferred_element_type=jnp.float32)         # (Bb*T, 3*HS) f32
    qkv = qkv.reshape(Bb, T, 3 * HS)

    scale = jnp.float32(HS) ** -0.5
    q = (qkv[..., 0 * HS:1 * HS] * scale).astype(cdt)         # (Bb, T, HS)
    k = qkv[..., 1 * HS:2 * HS].astype(cdt)
    v = qkv[..., 2 * HS:3 * HS].astype(cdt)

    # --- scores + causal mask ((T, T) mask broadcast over the batch block) ---
    scores = jnp.einsum("btd,bud->btu", q, k,
                        preferred_element_type=jnp.float32)   # (Bb, T, T) f32
    row = jax.lax.broadcasted_iota(jnp.int32, (T, T), 0)
    col = jax.lax.broadcasted_iota(jnp.int32, (T, T), 1)
    scores = jnp.where((row >= col)[None], scores, jnp.float32(-1e30))

    # --- un-normalized stable softmax; normalization deferred to after PV ---
    m = jnp.max(scores, axis=-1, keepdims=True)
    p = jnp.exp(scores - m)                                   # (Bb, T, T)
    denom = jnp.sum(p, axis=-1, keepdims=True)                # (Bb, T, 1)
    # TODO(synk): training-mode dropout on the attention weights and on the
    # projected output (pltpu.prng_seed / prng_random_bits) -- eval semantics here.

    head_out = jnp.einsum("btu,bud->btd", p.astype(cdt), v,
                          preferred_element_type=jnp.float32)  # (Bb, T, HS) f32
    if approx_recip:
        head_out = head_out * pl.reciprocal(denom, approx=True)   # EUP slot
    else:
        head_out = head_out / denom                                # exact (f32 path)

    # --- this head's contribution to the fused output projection (+= in f32) ---
    proj = jnp.dot(head_out.reshape(Bb * T, HS).astype(cdt), wproj_ref[0],
                   preferred_element_type=jnp.float32)         # (Bb*T, C)
    acc_ref[...] += proj.reshape(Bb, T, C)

    @pl.when(h == nh - 1)
    def _finalize():
        o_ref[...] = acc_ref[...].astype(o_ref.dtype)


# ------------------------ parameter packing (load time) ----------------------
def pack_mha_params(wq, wk, wv, wproj, bproj, compute_dtype=jnp.float32):
    """Pack torch-layout MHA params once, outside the per-call forward path.

    wq/wk/wv: (H, C, HS)  (already transposed from torch's (HS, C) per head)
    wproj:    (H*HS, C)   (already transposed from torch's (C, H*HS))
    bproj:    (C,)
    compute_dtype: MXU operand dtype. bfloat16 recommended on v5e/v6e/v7x (MXU is
                   bf16-native everywhere); softmax/masking/accumulation stay f32.
    """
    H, C, HS = wq.shape
    wqkv = jnp.concatenate([wq, wk, wv], axis=-1).astype(compute_dtype)  # (H,C,3HS)
    wprojh = wproj.reshape(H, HS, C).astype(compute_dtype)               # (H,HS,C)
    bproj2 = bproj.reshape(1, C).astype(jnp.float32)                     # (1,C)
    return wqkv, wprojh, bproj2


def _pick_block_b(B, T):
    bb = min(B, max(1, 256 // max(T, 1)))   # aim for ~256 rows per grid step
    while B % bb:
        bb -= 1
    return bb


# ---------------------------------- wrapper ----------------------------------
@functools.partial(jax.jit, static_argnames=("out_dtype", "block_b"))
def multi_head_attention(x, wqkv, wprojh, bproj2, *, out_dtype=None, block_b=None):
    """MultiHeadAttention forward (dropout = identity / eval mode).

    x:       (B, T, C)
    wqkv:    (H, C, 3*HS)  from pack_mha_params (operand dtype = compute dtype)
    wprojh:  (H, HS, C)
    bproj2:  (1, C) f32
    returns  (B, T, C) in `out_dtype` (default: x.dtype)
    """
    B, T, C = x.shape
    H, _, three_hs = wqkv.shape
    HS = three_hs // 3
    odt = x.dtype if out_dtype is None else out_dtype
    bb = _pick_block_b(B, T) if block_b is None else block_b

    cd_bytes = jnp.dtype(wqkv.dtype).itemsize
    approx_recip = jnp.dtype(wqkv.dtype) != jnp.dtype(jnp.float32)

    # Advisory scoped-VMEM limit derived from actual block / scratch / working-set
    # sizes, with 2x headroom (clamped to [32 MiB, 128 MiB]).
    est = (2 * bb * T * C * jnp.dtype(x.dtype).itemsize     # x block, double-buffered
           + 2 * bb * T * C * jnp.dtype(odt).itemsize        # out block
           + 2 * C * three_hs * cd_bytes                     # per-head QKV weights
           + 2 * HS * C * cd_bytes                           # per-head out-proj slice
           + bb * T * C * 4                                  # f32 accumulator scratch
           + 4 * bb * T * T * 4                              # scores / probs working set
           + 4 * bb * T * three_hs * 4)                      # qkv / head_out temps
    vmem_limit = int(min(128 * 1024 * 1024, max(32 * 1024 * 1024, 2 * est)))

    kernel = functools.partial(_mha_head_kernel, head_size=HS,
                               approx_recip=bool(approx_recip))

    return pl.pallas_call(
        kernel,
        out_shape=jax.ShapeDtypeStruct((B, T, C), odt),
        grid_spec=pltpu.PrefetchScalarGridSpec(
            num_scalar_prefetch=0,
            grid=(B // bb, H),                      # head axis innermost (accumulate)
            in_specs=[
                # x block is constant across the head axis -> fetched once per b.
                pl.BlockSpec((bb, T, C), lambda b, h: (b, 0, 0)),
                pl.BlockSpec((1, C, three_hs), lambda b, h: (h, 0, 0)),
                pl.BlockSpec((1, HS, C), lambda b, h: (h, 0, 0)),
                pl.BlockSpec((1, C), lambda b, h: (0, 0)),
            ],
            out_specs=pl.BlockSpec((bb, T, C), lambda b, h: (b, 0, 0)),
            scratch_shapes=[pltpu.VMEM((bb, T, C), jnp.float32)],
        ),
        compiler_params=pltpu.CompilerParams(
            dimension_semantics=("parallel", "arbitrary"),
            vmem_limit_bytes=vmem_limit,
        ),
    )(x, wqkv, wprojh, bproj2)


# ------------------------------ reference check ------------------------------
def _reference(x, wq, wk, wv, wproj, bproj):
    B, T, C = x.shape
    H, _, HS = wq.shape
    q = jnp.einsum("btc,hcs->bhts", x, wq)
    k = jnp.einsum("btc,hcs->bhts", x, wk)
    v = jnp.einsum("btc,hcs->bhts", x, wv)
    scores = jnp.einsum("bhts,bhus->bhtu", q, k) * (HS ** -0.5)
    mask = jnp.tril(jnp.ones((T, T), dtype=bool))
    scores = jnp.where(mask[None, None], scores, -jnp.inf)
    wei = jax.nn.softmax(scores, axis=-1)
    heads = jnp.einsum("bhtu,bhus->bhts", wei, v)
    cat = jnp.transpose(heads, (0, 2, 1, 3)).reshape(B, T, H * HS)
    return cat @ wproj + bproj


if __name__ == "__main__":
    # Config: block_size=8, n_embd=32, num_heads=4, head_size=8
    B, T, C = 2, 8, 32
    H, HS = 4, 8

    key = jax.random.PRNGKey(0)
    kx, kq, kk, kv, kp, kb = jax.random.split(key, 6)
    x = jax.random.normal(kx, (B, T, C), dtype=jnp.float32)
    wq = jax.random.normal(kq, (H, C, HS), dtype=jnp.float32) * 0.1
    wk = jax.random.normal(kk, (H, C, HS), dtype=jnp.float32) * 0.1
    wv = jax.random.normal(kv, (H, C, HS), dtype=jnp.float32) * 0.1
    wproj = jax.random.normal(kp, (H * HS, C), dtype=jnp.float32) * 0.1
    bproj = jax.random.normal(kb, (C,), dtype=jnp.float32) * 0.1

    ref = _reference(x, wq, wk, wv, wproj, bproj)

    # f32 operand path (exact softmax divide) -- tight tolerance
    params_f32 = pack_mha_params(wq, wk, wv, wproj, bproj,
                                 compute_dtype=jnp.float32)
    out = multi_head_attention(x, *params_f32)
    out = jax.block_until_ready(out)
    assert out.shape == (B, T, C), out.shape
    assert jnp.allclose(out, ref, atol=2e-3, rtol=2e-3), "f32 mismatch vs reference"

    # bf16 operand / f32 accumulation path (recommended on v5e / v6e / v7x MXUs)
    params_bf16 = pack_mha_params(wq, wk, wv, wproj, bproj,
                                  compute_dtype=jnp.bfloat16)
    out_bf16 = multi_head_attention(x, *params_bf16)
    out_bf16 = jax.block_until_ready(out_bf16)
    assert jnp.allclose(out_bf16.astype(jnp.float32), ref,
                        atol=1e-1, rtol=1e-1), "bf16 mismatch vs reference"

    print("KERNEL_OK")
</pallas_src>

<mosaic_0001>
module attributes {stable_mosaic.version = 11 : i64} {
  func.func @_mha_head_kernel(%arg0: i32, %arg1: i32, %arg2: memref<2x8x32xf32, #tpu.memory_space<vmem>>, %arg3: memref<1x32x24xf32, #tpu.memory_space<vmem>>, %arg4: memref<1x8x32xf32, #tpu.memory_space<vmem>>, %arg5: memref<1x32xf32, #tpu.memory_space<vmem>>, %arg6: memref<2x8x32xf32, #tpu.memory_space<vmem>>, %arg7: memref<2x8x32xf32, #tpu.memory_space<vmem>>) attributes {dimension_semantics = [#tpu.dimension_semantics<parallel>, #tpu.dimension_semantics<arbitrary>], iteration_bounds = array<i64: 1, 4>, scalar_prefetch = 0 : i64, scratch_operands = 1 : i64, tpu.core_type = #tpu.core_type<tc>, window_params = [{transform_indices = @transform_0, window_bounds = array<i64: 2, 8, 32>}, {transform_indices = @transform_1, window_bounds = array<i64: 1, 32, 24>}, {transform_indices = @transform_2, window_bounds = array<i64: 1, 8, 32>}, {pipeline_mode = #tpu.pipeline_mode<synchronous>, transform_indices = @transform_3, window_bounds = array<i64: 1, 32>}, {transform_indices = @transform_4, window_bounds = array<i64: 2, 8, 32>}]} {
    %c0_i32 = arith.constant 0 : i32
    %0 = arith.cmpi eq, %arg1, %c0_i32 : i32
    %1 = arith.extui %0 : i1 to i32
    %c0_i32_0 = arith.constant 0 : i32
    %2 = arith.cmpi ne, %1, %c0_i32_0 : i32
    scf.if %2 {
      %c0_24 = arith.constant 0 : index
      %c0_25 = arith.constant 0 : index
      %45 = vector.load %arg5[%c0_24, %c0_25] : memref<1x32xf32, #tpu.memory_space<vmem>>, vector<1x32xf32>
      %46 = vector.shape_cast %45 : vector<1x32xf32> to vector<1x1x32xf32>
      %47 = vector.broadcast %46 : vector<1x1x32xf32> to vector<2x8x32xf32>
      %c0_26 = arith.constant 0 : index
      %c0_27 = arith.constant 0 : index
      %c0_28 = arith.constant 0 : index
      %48 = vector.load %arg7[%c0_26, %c0_27, %c0_28] : memref<2x8x32xf32, #tpu.memory_space<vmem>>, vector<2x8x32xf32>
      tpu.vector_store %arg7[%c0_26, %c0_27, %c0_28], %47 {strides = array<i32>} : memref<2x8x32xf32, #tpu.memory_space<vmem>>, vector<2x8x32xf32>,
    } else {
    }
    %c0 = arith.constant 0 : index
    %c0_1 = arith.constant 0 : index
    %c0_2 = arith.constant 0 : index
    %3 = vector.load %arg2[%c0, %c0_1, %c0_2] : memref<2x8x32xf32, #tpu.memory_space<vmem>>, vector<2x8x32xf32>
    %4 = vector.shape_cast %3 : vector<2x8x32xf32> to vector<16x32xf32>
    %c0_3 = arith.constant 0 : index
    %c0_4 = arith.constant 0 : index
    %c0_5 = arith.constant 0 : index
    %5 = vector.load %arg3[%c0_3, %c0_4, %c0_5] : memref<1x32x24xf32, #tpu.memory_space<vmem>>, vector<1x32x24xf32>
    %6 = vector.shape_cast %5 : vector<1x32x24xf32> to vector<32x24xf32>
    %cst = arith.constant dense<0.000000e+00> : vector<16x24xf32>
    %7 = tpu.matmul %4, %6, %cst {dimension_numbers = #tpu.dot_dimension_numbers<[1], [0], [0], [1], [0, 0, 1, 1], [], []>} : vector<16x32xf32>, vector<32x24xf32>, vector<16x24xf32> -> vector<16x24xf32>
    %8 = vector.shape_cast %7 : vector<16x24xf32> to vector<2x8x24xf32>
    %cst_6 = arith.constant 8.000000e+00 : f32
    %cst_7 = arith.constant -5.000000e-01 : f32
    %9 = math.powf %cst_6, %cst_7 : f32
    %10 = vector.extract_strided_slice %8 {offsets = [0, 0, 0], sizes = [2, 8, 8], strides = [1, 1, 1]} : vector<2x8x24xf32> to vector<2x8x8xf32>
    %11 = vector.broadcast %9 : f32 to vector<2x8x8xf32>
    %12 = arith.mulf %10, %11 : vector<2x8x8xf32>
    %13 = vector.extract_strided_slice %8 {offsets = [0, 0, 8], sizes = [2, 8, 8], strides = [1, 1, 1]} : vector<2x8x24xf32> to vector<2x8x8xf32>
    %14 = vector.extract_strided_slice %8 {offsets = [0, 0, 16], sizes = [2, 8, 8], strides = [1, 1, 1]} : vector<2x8x24xf32> to vector<2x8x8xf32>
    "tpu.trace_start"() <{level = 10 : i32, message = "btd,bud->btu"}> : () -> ()
    %cst_8 = arith.constant dense<0.000000e+00> : vector<2x8x8xf32>
    %15 = tpu.matmul %12, %13, %cst_8 {dimension_numbers = #tpu.dot_dimension_numbers<[2], [2], [1], [1], [0, 0, 0, 1, 1, 1], [0], [0]>} : vector<2x8x8xf32>, vector<2x8x8xf32>, vector<2x8x8xf32> -> vector<2x8x8xf32>
    "tpu.trace_stop"() : () -> ()
    %16 = tpu.iota {dimensions = array<i32: 0>} : vector<8x8xi32>
    %17 = tpu.iota {dimensions = array<i32: 1>} : vector<8x8xi32>
    %18 = arith.cmpi sge, %16, %17 : vector<8x8xi32>
    %19 = vector.shape_cast %18 : vector<8x8xi1> to vector<1x8x8xi1>
    %cst_9 = arith.constant -1.000000e+30 : f32
    %20 = vector.shape_cast %19 : vector<1x8x8xi1> to vector<1x8x8xi1>
    %21 = vector.broadcast %20 : vector<1x8x8xi1> to vector<2x8x8xi1>
    %22 = vector.broadcast %cst_9 : f32 to vector<2x8x8xf32>
    %23 = arith.select %21, %15, %22 : vector<2x8x8xi1>, vector<2x8x8xf32>
    %cst_10 = arith.constant dense<0xFF800000> : vector<2x8xf32>
    %24 = vector.multi_reduction <maximumf>, %23, %cst_10 [2] : vector<2x8x8xf32> to vector<2x8xf32>
    %25 = vector.shape_cast %24 : vector<2x8xf32> to vector<2x8x1xf32>
    %26 = vector.broadcast %25 : vector<2x8x1xf32> to vector<2x8x8xf32>
    %27 = arith.subf %23, %26 : vector<2x8x8xf32>
    %28 = math.exp %27 : vector<2x8x8xf32>
    %cst_11 = arith.constant dense<0.000000e+00> : vector<2x8xf32>
    %29 = vector.multi_reduction <add>, %28, %cst_11 [2] : vector<2x8x8xf32> to vector<2x8xf32>
    %30 = vector.shape_cast %29 : vector<2x8xf32> to vector<2x8x1xf32>
    "tpu.trace_start"() <{level = 10 : i32, message = "btu,bud->btd"}> : () -> ()
    %cst_12 = arith.constant dense<0.000000e+00> : vector<2x8x8xf32>
    %31 = tpu.matmul %28, %14, %cst_12 {dimension_numbers = #tpu.dot_dimension_numbers<[2], [1], [1], [2], [0, 0, 0, 1, 1, 2], [0], [0]>} : vector<2x8x8xf32>, vector<2x8x8xf32>, vector<2x8x8xf32> -> vector<2x8x8xf32>
    "tpu.trace_stop"() : () -> ()
    %32 = vector.broadcast %30 : vector<2x8x1xf32> to vector<2x8x8xf32>
    %33 = arith.divf %31, %32 : vector<2x8x8xf32>
    %34 = vector.shape_cast %33 : vector<2x8x8xf32> to vector<16x8xf32>
    %c0_13 = arith.constant 0 : index
    %c0_14 = arith.constant 0 : index
    %c0_15 = arith.constant 0 : index
    %35 = vector.load %arg4[%c0_13, %c0_14, %c0_15] : memref<1x8x32xf32, #tpu.memory_space<vmem>>, vector<1x8x32xf32>
    %36 = vector.shape_cast %35 : vector<1x8x32xf32> to vector<8x32xf32>
    %cst_16 = arith.constant dense<0.000000e+00> : vector<16x32xf32>
    %37 = tpu.matmul %34, %36, %cst_16 {dimension_numbers = #tpu.dot_dimension_numbers<[1], [0], [0], [1], [0, 0, 1, 1], [], []>} : vector<16x8xf32>, vector<8x32xf32>, vector<16x32xf32> -> vector<16x32xf32>
    %c0_17 = arith.constant 0 : index
    %c0_18 = arith.constant 0 : index
    %c0_19 = arith.constant 0 : index
    %38 = vector.load %arg7[%c0_17, %c0_18, %c0_19] : memref<2x8x32xf32, #tpu.memory_space<vmem>>, vector<2x8x32xf32>
    %39 = vector.shape_cast %37 : vector<16x32xf32> to vector<2x8x32xf32>
    %40 = arith.addf %38, %39 : vector<2x8x32xf32>
    %c0_20 = arith.constant 0 : index
    %c0_21 = arith.constant 0 : index
    %c0_22 = arith.constant 0 : index
    %41 = vector.load %arg7[%c0_20, %c0_21, %c0_22] : memref<2x8x32xf32, #tpu.memory_space<vmem>>, vector<2x8x32xf32>
    tpu.vector_store %arg7[%c0_20, %c0_21, %c0_22], %40 {strides = array<i32>} : memref<2x8x32xf32, #tpu.memory_space<vmem>>, vector<2x8x32xf32>,
    %c3_i32 = arith.constant 3 : i32
    %42 = arith.cmpi eq, %arg1, %c3_i32 : i32
    %43 = arith.extui %42 : i1 to i32
    %c0_i32_23 = arith.constant 0 : i32
    %44 = arith.cmpi ne, %43, %c0_i32_23 : i32
    scf.if %44 {
      %c0_24 = arith.constant 0 : index
      %c0_25 = arith.constant 0 : index
      %c0_26 = arith.constant 0 : index
      %45 = vector.load %arg7[%c0_24, %c0_25, %c0_26] : memref<2x8x32xf32, #tpu.memory_space<vmem>>, vector<2x8x32xf32>
      %c0_27 = arith.constant 0 : index
      %c0_28 = arith.constant 0 : index
      %c0_29 = arith.constant 0 : index
      %46 = vector.load %arg6[%c0_27, %c0_28, %c0_29] : memref<2x8x32xf32, #tpu.memory_space<vmem>>, vector<2x8x32xf32>
      tpu.vector_store %arg6[%c0_27, %c0_28, %c0_29], %45 {strides = array<i32>} : memref<2x8x32xf32, #tpu.memory_space<vmem>>, vector<2x8x32xf32>,
    } else {
    }
    return
  }
  func.func @transform_0(%arg0: i32, %arg1: i32) -> (i32, i32, i32) {
    %c0_i32 = arith.constant 0 : i32
    %c0_i32_0 = arith.constant 0 : i32
    %c0_i32_1 = arith.constant 0 : i32
    return %arg0, %c0_i32, %c0_i32_0 : i32, i32, i32
  }
  func.func @transform_1(%arg0: i32, %arg1: i32) -> (i32, i32, i32) {
    %c0_i32 = arith.constant 0 : i32
    %c0_i32_0 = arith.constant 0 : i32
    %c0_i32_1 = arith.constant 0 : i32
    return %arg1, %c0_i32, %c0_i32_0 : i32, i32, i32
  }
  func.func @transform_2(%arg0: i32, %arg1: i32) -> (i32, i32, i32) {
    %c0_i32 = arith.constant 0 : i32
    %c0_i32_0 = arith.constant 0 : i32
    %c0_i32_1 = arith.constant 0 : i32
    return %arg1, %c0_i32, %c0_i32_0 : i32, i32, i32
  }
  func.func @transform_3(%arg0: i32, %arg1: i32) -> (i32, i32) {
    %c0_i32 = arith.constant 0 : i32
    %c0_i32_0 = arith.constant 0 : i32
    %c0_i32_1 = arith.constant 0 : i32
    return %c0_i32, %c0_i32_0 : i32, i32
  }
  func.func @transform_4(%arg0: i32, %arg1: i32) -> (i32, i32, i32) {
    %c0_i32 = arith.constant 0 : i32
    %c0_i32_0 = arith.constant 0 : i32
    %c0_i32_1 = arith.constant 0 : i32
    return %arg0, %c0_i32, %c0_i32_0 : i32, i32, i32
  }
}

</mosaic_0001>

<llo_original>
// kernel: multi_head_attention.1
$region0: #{multi_head_attention.1}
  #allocation0 [shape = 'u32[]', space=smem, size = 0x4, offset = 0x4, fixed_abs, tag = 'smem constant byte address 0x4 - core index']
  #allocation1 [shape = 'u32[144,128]{1,0:T(1,128)}', space=vmem, size = 0x12000, scoped, tag = 'internal scratch']
  #allocation2 [shape = 'f32[2,8,32]{2,1,0:T(8,128)}', space=vmem, size = 0x2000, scoped, tag = 'scratch operand']
  %s0 = inlined_call_operand.vmem [shape: f32[2,8,32], index: 0, kind: input, shape index: {}]
  %s1 = inlined_call_operand.vmem [shape: f32[4,32,24], index: 1, kind: input, shape index: {}]
  %s2 = inlined_call_operand.vmem [shape: f32[4,8,32], index: 2, kind: input, shape index: {}]
  %s3 = inlined_call_operand.vmem [shape: f32[1,32], index: 3, kind: input, shape index: {}]
  %s4 = inlined_call_operand.hbm [shape: f32[2,8,32], index: 4, kind: output, shape index: {}]
  %s5 = sld [smem:[#allocation0]]
  $region57: #{multi_head_attention.1} parent=0
    _
  %s7 = ssub.s32 1, %s5
  %s8 = scalar_select 0, %s7, %s5
  $region1: #{multi_head_attention.1} parent=0
    #allocation3 [shape = 'u8[8192]{0}', space=vmem, size = 0x2000, scoped, tag = 'output window, operand 0, single buffered']
    #allocation4 [shape = 's32[2]{0}', space=sflag, size = 0x8, scoped, tag = 'scoped memory for multi_head_attention.1']
    %9 = vsyncpa [#allocation4], 0
    loop: start=0, step=1, limit=6
    $region2: #{multi_head_attention.1} parent=1 // loop_pre_header
      _
    $region3: #{multi_head_attention.1} parent=1 // loop_header
      %s11 = sphi 0, %s15
      %p12 = scmp.ge.s32.totalorder %s11, 6
      %s18 = sphi 0, %s30
      %s19 = sphi 0, %s26
      %s20 = sphi 0, %s18
      %s21 = sphi 0, %s19
      %s22 = sphi 0, %s20
      %s23 = sphi 0, %s21
      %s33 = sphi 0, %s35
      %s36 = sphi 0, %s33
      %s37 = sphi 0, %s36
      %s53 = sphi 0, %s37
      %s59 = sphi 0, %s61
      %s62 = sphi 0, %s59
      %s63 = sphi 0, %s62
      %s79 = sphi 0, %s63
      %s85 = sphi 0, %s87
      %s88 = sphi 0, %s85
      %s89 = sphi 0, %s88
      %s105 = sphi 0, %s89
      %s109 = sphi 0, %s109
      %s111 = sphi 0, %s109
      %s112 = sphi 0, %s111
      %s126 = sphi 0, %s112
      %s132 = sphi 0, %s134
      %s135 = sphi 0, %s132
      %s136 = sphi 0, %s135
      %s152 = sphi 0, %s136
    $region4: #{multi_head_attention.1} parent=1 // loop_header_branch
      %14 = sbr.rel (%p12) target = $region8
    $region5: #{multi_head_attention.1} parent=1 // loop_body
      %s16 = ssub.s32 %s11, 1
      %s17 = ssub.s32 %s11, 2
      %s24 = sadd.s32 1, %s19
      %p25 = scmp.ge.s32.totalorder %s24, 4
      %s26 = scalar_select %p25, 0, %s24
      %s27 = sadd.s32 1, %s18
      %s28 = scalar_select %p25, %s27, %s18
      %p29 = scmp.ge.s32.totalorder %s28, 1
      %s30 = scalar_select %p29, 0, %s28
      %s31 = ssub.s32 %s18, %s30
      %p32 = scmp.eq.s32.totalorder %s31, 0
      %s34 = sadd.s32 %s33, 1
      %s35 = scalar_select %p32, %s33, %s34
      %p38 = pneg %p32
      %p39 = scmp.eq.s32.totalorder %s11, 3
      %p40 = por %p38, %p39
      %p41 = scmp.ne.s32.totalorder %s33, %s36
      %p42 = scmp.eq.s32.totalorder %s11, 0
      %p43 = por %p41, %p42
      %p44 = scmp.ne.s32.totalorder %s33, %s36
      %p45 = scmp.eq.s32.totalorder %s16, 3
      %p46 = por %p44, %p45
      %p47 = scmp.ne.s32.totalorder %s36, %s37
      %p48 = scmp.eq.s32.totalorder %s16, 0
      %p49 = por %p47, %p48
      %p50 = scmp.ne.s32.totalorder %s36, %s37
      %p51 = scmp.eq.s32.totalorder %s17, 3
      %p52 = por %p50, %p51
      %p54 = scmp.ne.s32.totalorder %s37, %s53
      %p55 = scmp.eq.s32.totalorder %s17, 0
      %p56 = por %p54, %p55
      %s57 = ssub.s32 %s19, %s26
      %p58 = scmp.eq.s32.totalorder %s57, 0
      %s60 = sadd.s32 %s59, 1
      %s61 = scalar_select %p58, %s59, %s60
      %p64 = pneg %p58
      %p65 = scmp.eq.s32.totalorder %s11, 3
      %p66 = por %p64, %p65
      %p67 = scmp.ne.s32.totalorder %s59, %s62
      %p68 = scmp.eq.s32.totalorder %s11, 0
      %p69 = por %p67, %p68
      %p70 = scmp.ne.s32.totalorder %s59, %s62
      %p71 = scmp.eq.s32.totalorder %s16, 3
      %p72 = por %p70, %p71
      %p73 = scmp.ne.s32.totalorder %s62, %s63
      %p74 = scmp.eq.s32.totalorder %s16, 0
      %p75 = por %p73, %p74
      %p76 = scmp.ne.s32.totalorder %s62, %s63
      %p77 = scmp.eq.s32.totalorder %s17, 3
      %p78 = por %p76, %p77
      %p80 = scmp.ne.s32.totalorder %s63, %s79
      %p81 = scmp.eq.s32.totalorder %s17, 0
      %p82 = por %p80, %p81
      %s83 = ssub.s32 %s19, %s26
      %p84 = scmp.eq.s32.totalorder %s83, 0
      %s86 = sadd.s32 %s85, 1
      %s87 = scalar_select %p84, %s85, %s86
      %p90 = pneg %p84
      %p91 = scmp.eq.s32.totalorder %s11, 3
      %p92 = por %p90, %p91
      %p93 = scmp.ne.s32.totalorder %s85, %s88
      %p94 = scmp.eq.s32.totalorder %s11, 0
      %p95 = por %p93, %p94
      %p96 = scmp.ne.s32.totalorder %s85, %s88
      %p97 = scmp.eq.s32.totalorder %s16, 3
      %p98 = por %p96, %p97
      %p99 = scmp.ne.s32.totalorder %s88, %s89
      %p100 = scmp.eq.s32.totalorder %s16, 0
      %p101 = por %p99, %p100
      %p102 = scmp.ne.s32.totalorder %s88, %s89
      %p103 = scmp.eq.s32.totalorder %s17, 3
      %p104 = por %p102, %p103
      %p106 = scmp.ne.s32.totalorder %s89, %s105
      %p107 = scmp.eq.s32.totalorder %s17, 0
      %p108 = por %p106, %p107
      %s110 = sadd.s32 %s109, 1
      %p113 = scmp.eq.s32.totalorder %s11, 3
      %p114 = scmp.ne.s32.totalorder %s109, %s111
      %p115 = scmp.eq.s32.totalorder %s11, 0
      %p116 = por %p114, %p115
      %p117 = scmp.ne.s32.totalorder %s109, %s111
      %p118 = scmp.eq.s32.totalorder %s16, 3
      %p119 = por %p117, %p118
      %p120 = scmp.ne.s32.totalorder %s111, %s112
      %p121 = scmp.eq.s32.totalorder %s16, 0
      %p122 = por %p120, %p121
      %p123 = scmp.ne.s32.totalorder %s111, %s112
      %p124 = scmp.eq.s32.totalorder %s17, 3
      %p125 = por %p123, %p124
      %p127 = scmp.ne.s32.totalorder %s112, %s126
      %p128 = scmp.eq.s32.totalorder %s17, 0
      %p129 = por %p127, %p128
      %s130 = ssub.s32 %s18, %s30
      %p131 = scmp.eq.s32.totalorder %s130, 0
      %s133 = sadd.s32 %s132, 1
      %s134 = scalar_select %p131, %s132, %s133
      %p137 = pneg %p131
      %p138 = scmp.eq.s32.totalorder %s11, 3
      %p139 = por %p137, %p138
      %p140 = scmp.ne.s32.totalorder %s132, %s135
      %p141 = scmp.eq.s32.totalorder %s11, 0
      %p142 = por %p140, %p141
      %p143 = scmp.ne.s32.totalorder %s132, %s135
      %p144 = scmp.eq.s32.totalorder %s16, 3
      %p145 = por %p143, %p144
      %p146 = scmp.ne.s32.totalorder %s135, %s136
      %p147 = scmp.eq.s32.totalorder %s16, 0
      %p148 = por %p146, %p147
      %p149 = scmp.ne.s32.totalorder %s135, %s136
      %p150 = scmp.eq.s32.totalorder %s17, 3
      %p151 = por %p149, %p150
      %p153 = scmp.ne.s32.totalorder %s136, %s152
      %p154 = scmp.eq.s32.totalorder %s17, 0
      %p155 = por %p153, %p154
      %p156 = scmp.le.s32.totalorder 1, %s11
      %p157 = scmp.lt.s32.totalorder %s11, 5
      %p158 = pnand %p156, %p157
      %p159 = pneg %p158
      // Predicated region
      $region9: #{multi_head_attention.1} parent=5 // pred_check
        _
      $region10: #{multi_head_attention.1} parent=5 // pred_check_branch
        %161 = sbr.rel (%p158) target = $region12
      $region11: #{multi_head_attention.1} parent=5 // pred_region
        %s162 = ssub.s32 %s11, 1
        // Predicated region
        $region13: #{multi_head_attention.1} parent=11 // pred_check
          %p163 = pneg %p49
        $region14: #{multi_head_attention.1} parent=11 // pred_check_branch
          %165 = sbr.rel (%p163) target = $region16
        $region15: #{multi_head_attention.1} parent=11 // pred_region
          %s166 = smul.u32 2, %s20
          %p167 = scmp.lt.s32.totalorder %s166, 1
          %s168 = scalar_select %p167, %s166, 1
          %s169 = smul.addr %s168, 8
          %s170 = scalar_lea.vmem %s0, %s169
          %s171 = smul.u32 2, %s20
        $region16: #{multi_head_attention.1} parent=11 // pred_fallthru
          _
        // Predicated region
        $region17: #{multi_head_attention.1} parent=11 // pred_check
          %p172 = pneg %p122
        $region18: #{multi_head_attention.1} parent=11 // pred_check_branch
          %174 = sbr.rel (%p172) target = $region20
        $region19: #{multi_head_attention.1} parent=11 // pred_region
          _
        $region20: #{multi_head_attention.1} parent=11 // pred_fallthru
          _
      $region12: #{multi_head_attention.1} parent=5 // pred_fallthru
        _
      %p175 = scmp.lt.s32.totalorder %s11, 4
      // Predicated region
      $region21: #{multi_head_attention.1} parent=5 // pred_check
        %p176 = pneg %p175
      $region22: #{multi_head_attention.1} parent=5 // pred_check_branch
        %178 = sbr.rel (%p176) target = $region24
      $region23: #{multi_head_attention.1} parent=5 // pred_region
        // Predicated region
        $region25: #{multi_head_attention.1} parent=23 // pred_check
          %p179 = pneg %p69
        $region26: #{multi_head_attention.1} parent=23 // pred_check_branch
          %181 = sbr.rel (%p179) target = $region28
        $region27: #{multi_head_attention.1} parent=23 // pred_region
          %p182 = scmp.lt.s32.totalorder %s19, 3
          %s183 = scalar_select %p182, %s19, 3
          %s184 = smul.addr %s183, 4
          %s185 = smul.addr %s184, 8
          %s186 = scalar_lea.vmem %s1, %s185
        $region28: #{multi_head_attention.1} parent=23 // pred_fallthru
          _
        // Predicated region
        $region29: #{multi_head_attention.1} parent=23 // pred_check
          %p187 = pneg %p95
        $region30: #{multi_head_attention.1} parent=23 // pred_check_branch
          %189 = sbr.rel (%p187) target = $region32
        $region31: #{multi_head_attention.1} parent=23 // pred_region
          %p190 = scmp.lt.s32.totalorder %s19, 3
          %s191 = scalar_select %p190, %s19, 3
          %s192 = smul.addr %s191, 8
          %s193 = scalar_lea.vmem %s2, %s192
        $region32: #{multi_head_attention.1} parent=23 // pred_fallthru
          _
      $region24: #{multi_head_attention.1} parent=5 // pred_fallthru
        _
      %p194 = scmp.le.s32.totalorder 1, %s11
      %p195 = scmp.lt.s32.totalorder %s11, 5
      %p196 = pnand %p194, %p195
      %p197 = pneg %p196
      // Predicated region
      $region33: #{multi_head_attention.1} parent=5 // pred_check
        _
      $region34: #{multi_head_attention.1} parent=5 // pred_check_branch
        %199 = sbr.rel (%p196) target = $region36
      $region35: #{multi_head_attention.1} parent=5 // pred_region
        %s200 = ssub.s32 %s11, 1
        %s201 = smul.u32 2, %s20
        %p202 = scmp.lt.s32.totalorder %s201, 1
        %s203 = scalar_select %p202, %s201, 1
        %s204 = smul.addr %s203, 8
        %s205 = scalar_lea.vmem %s0, %s204
        %p206 = pneg %p49
        %p207 = pneg %p46
        %p208 = scmp.lt.s32.totalorder %s21, 3
        %s209 = scalar_select %p208, %s21, 3
        %s210 = smul.addr %s209, 4
        %s211 = smul.addr %s210, 8
        %s212 = scalar_lea.vmem %s1, %s211
        %p213 = pneg %p75
        %p214 = pneg %p72
        %p215 = scmp.lt.s32.totalorder %s21, 3
        %s216 = scalar_select %p215, %s21, 3
        %s217 = smul.addr %s216, 8
        %s218 = scalar_lea.vmem %s2, %s217
        %p219 = pneg %p101
        %p220 = pneg %p98
        %p221 = pneg %p122
        %p222 = pneg %p119
        %p223 = pneg %p148
        %p224 = pneg %p145
        %s225 = smul.u32 2, %s20
        %p226 = scmp.lt.s32.totalorder %s225, 1
        %s227 = scalar_select %p226, %s225, 1
        %s228 = smul.addr %s227, 8
        %s229 = scalar_lea.vmem %s0, %s228
        %s230 = smul.u32 2, %s20
        %p231 = scmp.lt.s32.totalorder %s21, 3
        %s232 = scalar_select %p231, %s21, 3
        %s233 = smul.addr %s232, 4
        %s234 = smul.addr %s233, 8
        %s235 = scalar_lea.vmem %s1, %s234
        %p236 = scmp.lt.s32.totalorder %s21, 3
        %s237 = scalar_select %p236, %s21, 3
        %s238 = smul.addr %s237, 8
        %s239 = scalar_lea.vmem %s2, %s238
        %s240 = smul.u32 2, %s20
        %p241 = scmp.eq.s32.totalorder %s21, 0
        // Predicated region
        $region37: #{multi_head_attention.1} parent=35 // pred_check
          %p242 = pneg %p241
        $region38: #{multi_head_attention.1} parent=35 // pred_check_branch
          %244 = sbr.rel (%p242) target = $region40
        $region39: #{multi_head_attention.1} parent=35 // pred_region
          %v245 = vld [vmem:[%s3] sm:$0x1]
          %v247 = vlaneseq
          %v248 = vshrl.u32 %v247, 7
          %v249 = vsub.s32 0, %v248
          %v250 = vrot.slane %v245, %v249
          %vm252 = vcmask 261120
          %253 = vst.msk [vmem:[#allocation2] sm:$0xff] %vm252, %v250
          %254 = vst.msk [vmem:[#allocation2 + $0x8] sm:$0xff] %vm252, %v250
        $region40: #{multi_head_attention.1} parent=35 // pred_fallthru
          _
        %v255 = vld [vmem:[%s229] sm:$0xff]
        %v256 = vld [vmem:[%s229 + $0x8] sm:$0xff]
        %v257 = vld [vmem:[%s235] sm:$0xff]
        %v258 = vld [vmem:[%s235 + $0x8] sm:$0xff]
        %v259 = vld [vmem:[%s235 + $0x10] sm:$0xff]
        %v260 = vld [vmem:[%s235 + $0x18] sm:$0xff]
        %vm261 = vcmask 261120
        %v263 = vsel %vm261, %v255, 0
        %v266 = vsel %vm261, %v256, 0
        %268 = vmatprep.subr.mxu0 0.0
        %269 = vmatpush1.msra.mxu0 %v257
        %270 = vmatprep.subr.mxu0 0.0
        %271 = vmatpush1.msra.mxu0 %v258
        %272 = vmatprep.subr.mxu0 0.0
        %273 = vmatpush1.msra.mxu0 %v259
        %274 = vmatprep.subr.mxu0 0.0
        %275 = vmatpush1.msra.mxu0 %v260
        %276 = vmatprep.subr.mxu0 0.0
        %277 = vmatpush1.msra.mxu0 0.0
        %278 = vmatprep.subr.mxu0 0.0
        %279 = vmatpush1.msra.mxu0 0.0
        %280 = vmatprep.subr.mxu0 0.0
        %281 = vmatpush1.msra.mxu0 0.0
        %282 = vmatprep.subr.mxu0 0.0
        %283 = vmatpush1.msra.mxu0 0.0
        %284 = vmatprep.subr.mxu0 0.0
        %285 = vmatpush1.msra.mxu0 0.0
        %286 = vmatprep.subr.mxu0 0.0
        %287 = vmatpush1.msra.mxu0 0.0
        %288 = vmatprep.subr.mxu0 0.0
        %289 = vmatpush1.msra.mxu0 0.0
        %290 = vmatprep.subr.mxu0 0.0
        %291 = vmatpush1.msra.mxu0 0.0
        %292 = vmatprep.subr.mxu0 0.0
        %293 = vmatpush1.msra.mxu0 0.0
        %294 = vmatprep.subr.mxu0 0.0
        %295 = vmatpush1.msra.mxu0 0.0
        %296 = vmatprep.subr.mxu0 0.0
        %297 = vmatpush1.msra.mxu0 0.0
        %298 = vmatprep.subr.mxu0 0.0
        %299 = vmatpush1.msra.mxu0 0.0
        %300 = vmatprep.subr.mxu0 0.0
        %301 = vmatpush1.msra.mxu0 0.0
        %302 = vmatprep.subr.mxu0 0.0
        %303 = vmatpush1.msra.mxu0 0.0
        %304 = vmatprep.subr.mxu0 0.0
        %305 = vmatpush1.msra.mxu0 0.0
        %306 = vmatprep.subr.mxu0 0.0
        %307 = vmatpush1.msra.mxu0 0.0
        %308 = vmatprep.subr.mxu0 0.0
        %309 = vmatpush1.msra.mxu0 0.0
        %310 = vmatprep.subr.mxu0 0.0
        %311 = vmatpush1.msra.mxu0 0.0
        %312 = vmatprep.subr.mxu0 0.0
        %313 = vmatpush1.msra.mxu0 0.0
        %314 = vmatprep.subr.mxu0 0.0
        %315 = vmatpush1.msra.mxu0 0.0
        %316 = vmatprep.subr.mxu0 0.0
        %317 = vmatpush1.msra.mxu0 0.0
        %318 = vmatprep.subr.mxu0 0.0
        %319 = vmatpush1.msra.mxu0 0.0
        %320 = vmatprep.subr.mxu0 0.0
        %321 = vmatpush1.msra.mxu0 0.0
        %322 = vmatprep.subr.mxu0 0.0
        %323 = vmatpush1.msra.mxu0 0.0
        %324 = vmatprep.subr.mxu0 0.0
        %325 = vmatpush1.msra.mxu0 0.0
        %326 = vmatprep.subr.mxu0 0.0
        %327 = vmatpush1.msra.mxu0 0.0
        %328 = vmatprep.subr.mxu0 0.0
        %329 = vmatpush1.msra.mxu0 0.0
        %330 = vmatprep.subr.mxu0 0.0
        %331 = vmatpush1.msra.mxu0 0.0
        %332 = vmatprep.mubr.f32.mxu0 0.0
        %333 = vmatmul.mubr.f32.gmra.mrb[0].mxu0 %v263
        %v334 = vpop.f32.mrb[0].mxu0
        %v335 = vadd.f32 0.0, %v334
        %v336 = vpop.f32.mrb[0].mxu0
        %337 = vmatprep.mubr.f32.mxu0 0.0
        %338 = vmatmul.mubr.f32.gmra.mrb[0].mxu0 %v266
        %v339 = vpop.f32.mrb[0].mxu0
        %v340 = vadd.f32 0.0, %v339
        %v341 = vpop.f32.mrb[0].mxu0
        %342 = vdwg.mxu0
        %v343 = vmul.f32 %v335, 0.35355338
        %v344 = vmul.f32 %v340, 0.35355338
        %346 = vrot.lane.b32.xlu0 %v335, 120
        %v347 = vpop.permute.xlu0 %346
        %vm348 = vcmask 64512
        %v350 = vsel %vm348, %v343, 0
        %v352 = vsel %vm348, %v347, 0
        %354 = vmatprep.subr.mxu0 0.0
        %355 = vmatpush1.xpose.msra.mxu0 %v352
        %356 = vmatprep.subr.mxu0 0.0
        %357 = vmatpush1.xpose.msra.mxu0 0.0
        %358 = vmatprep.subr.mxu0 0.0
        %359 = vmatpush1.xpose.msra.mxu0 0.0
        %360 = vmatprep.subr.mxu0 0.0
        %361 = vmatpush1.xpose.msra.mxu0 0.0
        %362 = vmatprep.subr.mxu0 0.0
        %363 = vmatpush1.xpose.msra.mxu0 0.0
        %364 = vmatprep.subr.mxu0 0.0
        %365 = vmatpush1.xpose.msra.mxu0 0.0
        %366 = vmatprep.subr.mxu0 0.0
        %367 = vmatpush1.xpose.msra.mxu0 0.0
        %368 = vmatprep.subr.mxu0 0.0
        %369 = vmatpush1.xpose.msra.mxu0 0.0
        %370 = vmatprep.subr.mxu0 0.0
        %371 = vmatpush1.xpose.msra.mxu0 0.0
        %372 = vmatprep.subr.mxu0 0.0
        %373 = vmatpush1.xpose.msra.mxu0 0.0
        %374 = vmatprep.subr.mxu0 0.0
        %375 = vmatpush1.xpose.msra.mxu0 0.0
        %376 = vmatprep.subr.mxu0 0.0
        %377 = vmatpush1.xpose.msra.mxu0 0.0
        %378 = vmatprep.subr.mxu0 0.0
        %379 = vmatpush1.xpose.msra.mxu0 0.0
        %380 = vmatprep.subr.mxu0 0.0
        %381 = vmatpush1.xpose.msra.mxu0 0.0
        %382 = vmatprep.subr.mxu0 0.0
        %383 = vmatpush1.xpose.msra.mxu0 0.0
        %384 = vmatprep.subr.mxu0 0.0
        %385 = vmatpush1.xpose.msra.mxu0 0.0
        %386 = vmatprep.subr.mxu0 0.0
        %387 = vmatpush1.xpose.msra.mxu0 0.0
        %388 = vmatprep.subr.mxu0 0.0
        %389 = vmatpush1.xpose.msra.mxu0 0.0
        %390 = vmatprep.subr.mxu0 0.0
        %391 = vmatpush1.xpose.msra.mxu0 0.0
        %392 = vmatprep.subr.mxu0 0.0
        %393 = vmatpush1.xpose.msra.mxu0 0.0
        %394 = vmatprep.subr.mxu0 0.0
        %395 = vmatpush1.xpose.msra.mxu0 0.0
        %396 = vmatprep.subr.mxu0 0.0
        %397 = vmatpush1.xpose.msra.mxu0 0.0
        %398 = vmatprep.subr.mxu0 0.0
        %399 = vmatpush1.xpose.msra.mxu0 0.0
        %400 = vmatprep.subr.mxu0 0.0
        %401 = vmatpush1.xpose.msra.mxu0 0.0
        %402 = vmatprep.subr.mxu0 0.0
        %403 = vmatpush1.xpose.msra.mxu0 0.0
        %404 = vmatprep.subr.mxu0 0.0
        %405 = vmatpush1.xpose.msra.mxu0 0.0
        %406 = vmatprep.subr.mxu0 0.0
        %407 = vmatpush1.xpose.msra.mxu0 0.0
        %408 = vmatprep.subr.mxu0 0.0
        %409 = vmatpush1.xpose.msra.mxu0 0.0
        %410 = vmatprep.subr.mxu0 0.0
        %411 = vmatpush1.xpose.msra.mxu0 0.0
        %412 = vmatprep.subr.mxu0 0.0
        %413 = vmatpush1.xpose.msra.mxu0 0.0
        %414 = vmatprep.subr.mxu0 0.0
        %415 = vmatpush1.xpose.msra.mxu0 0.0
        %416 = vmatprep.subr.mxu0 0.0
        %417 = vmatpush1.xpose.msra.mxu0 0.0
        %418 = vmatprep.mubr.f32.mxu0 0.0
        %419 = vmatmul.mubr.f32.gmra.mrb[0].mxu0 %v350
        %v420 = vpop.f32.mrb[0].mxu0
        %v421 = vadd.f32 0.0, %v420
        %v422 = vpop.f32.mrb[0].mxu0
        %423 = vdwg.mxu0
        %425 = vrot.lane.b32.xlu0 %v340, 120
        %v426 = vpop.permute.xlu0 %425
        %v428 = vsel %vm348, %v344, 0
        %v430 = vsel %vm348, %v426, 0
        %432 = vmatprep.subr.mxu0 0.0
        %433 = vmatpush1.xpose.msra.mxu0 %v430
        %434 = vmatprep.subr.mxu0 0.0
        %435 = vmatpush1.xpose.msra.mxu0 0.0
        %436 = vmatprep.subr.mxu0 0.0
        %437 = vmatpush1.xpose.msra.mxu0 0.0
        %438 = vmatprep.subr.mxu0 0.0
        %439 = vmatpush1.xpose.msra.mxu0 0.0
        %440 = vmatprep.subr.mxu0 0.0
        %441 = vmatpush1.xpose.msra.mxu0 0.0
        %442 = vmatprep.subr.mxu0 0.0
        %443 = vmatpush1.xpose.msra.mxu0 0.0
        %444 = vmatprep.subr.mxu0 0.0
        %445 = vmatpush1.xpose.msra.mxu0 0.0
        %446 = vmatprep.subr.mxu0 0.0
        %447 = vmatpush1.xpose.msra.mxu0 0.0
        %448 = vmatprep.subr.mxu0 0.0
        %449 = vmatpush1.xpose.msra.mxu0 0.0
        %450 = vmatprep.subr.mxu0 0.0
        %451 = vmatpush1.xpose.msra.mxu0 0.0
        %452 = vmatprep.subr.mxu0 0.0
        %453 = vmatpush1.xpose.msra.mxu0 0.0
        %454 = vmatprep.subr.mxu0 0.0
        %455 = vmatpush1.xpose.msra.mxu0 0.0
        %456 = vmatprep.subr.mxu0 0.0
        %457 = vmatpush1.xpose.msra.mxu0 0.0
        %458 = vmatprep.subr.mxu0 0.0
        %459 = vmatpush1.xpose.msra.mxu0 0.0
        %460 = vmatprep.subr.mxu0 0.0
        %461 = vmatpush1.xpose.msra.mxu0 0.0
        %462 = vmatprep.subr.mxu0 0.0
        %463 = vmatpush1.xpose.msra.mxu0 0.0
        %464 = vmatprep.subr.mxu0 0.0
        %465 = vmatpush1.xpose.msra.mxu0 0.0
        %466 = vmatprep.subr.mxu0 0.0
        %467 = vmatpush1.xpose.msra.mxu0 0.0
        %468 = vmatprep.subr.mxu0 0.0
        %469 = vmatpush1.xpose.msra.mxu0 0.0
        %470 = vmatprep.subr.mxu0 0.0
        %471 = vmatpush1.xpose.msra.mxu0 0.0
        %472 = vmatprep.subr.mxu0 0.0
        %473 = vmatpush1.xpose.msra.mxu0 0.0
        %474 = vmatprep.subr.mxu0 0.0
        %475 = vmatpush1.xpose.msra.mxu0 0.0
        %476 = vmatprep.subr.mxu0 0.0
        %477 = vmatpush1.xpose.msra.mxu0 0.0
        %478 = vmatprep.subr.mxu0 0.0
        %479 = vmatpush1.xpose.msra.mxu0 0.0
        %480 = vmatprep.subr.mxu0 0.0
        %481 = vmatpush1.xpose.msra.mxu0 0.0
        %482 = vmatprep.subr.mxu0 0.0
        %483 = vmatpush1.xpose.msra.mxu0 0.0
        %484 = vmatprep.subr.mxu0 0.0
        %485 = vmatpush1.xpose.msra.mxu0 0.0
        %486 = vmatprep.subr.mxu0 0.0
        %487 = vmatpush1.xpose.msra.mxu0 0.0
        %488 = vmatprep.subr.mxu0 0.0
        %489 = vmatpush1.xpose.msra.mxu0 0.0
        %490 = vmatprep.subr.mxu0 0.0
        %491 = vmatpush1.xpose.msra.mxu0 0.0
        %492 = vmatprep.subr.mxu0 0.0
        %493 = vmatpush1.xpose.msra.mxu0 0.0
        %494 = vmatprep.subr.mxu0 0.0
        %495 = vmatpush1.xpose.msra.mxu0 0.0
        %496 = vmatprep.mubr.f32.mxu0 0.0
        %497 = vmatmul.mubr.f32.gmra.mrb[0].mxu0 %v428
        %v498 = vpop.f32.mrb[0].mxu0
        %v499 = vadd.f32 0.0, %v498
        %v500 = vpop.f32.mrb[0].mxu0
        %501 = vdwg.mxu0
        %v502 = vlaneseq
        %v503 = vshrl.u32 %v502, 7
        %v504 = vlaneseq
        %v505 = vand.u32 %v504, 127
        %vm506 = vcmp.ge.s32.totalorder %v503, %v505
        %v507 = vsel %vm506, 1, 0
        %vm508 = vcmp.eq.s32.totalorder %v507, 1
        %v509 = vsel %vm508, %v421, -1e+30
        %v510 = vsel %vm508, %v499, -1e+30
        %v511 = vsel %vm348, %v509, -inf
        %512 = vmax.xlane.f32.xlu0 %v511
        %v513 = vpop.xlane.xlu0 %512
        %v514 = vsel %vm348, %v510, -inf
        %515 = vmax.xlane.f32.xlu0 %v514
        %v516 = vpop.xlane.xlu0 %515
        %v517 = vsub.f32 %v509, %v513
        %v518 = vsub.f32 %v510, %v516
        %v519 = vmul.f32 %v517, 1.442695
        %v520 = vpow.pop %v519
        %v521 = vmul.f32 %v518, 1.442695
        %v522 = vpow.pop %v521
        %v523 = vsel %vm348, %v520, 0.0
        %524 = vadd.xlane.f32.xlu0 %v523
        %v525 = vpop.xlane.xlu0 %524
        %v526 = vsel %vm348, %v522, 0.0
        %527 = vadd.xlane.f32.xlu0 %v526
        %v528 = vpop.xlane.xlu0 %527
        %529 = vrot.lane.b32.xlu0 %v335, 112
        %v530 = vpop.permute.xlu0 %529
        %v533 = vsel %vm348, %v520, 0
        %535 = vmatprep.subr.mxu0 0.0
        %536 = vmatpush1.msra.mxu0 %v530
        %537 = vmatprep.subr.mxu0 0.0
        %538 = vmatpush1.msra.mxu0 0.0
        %539 = vmatprep.subr.mxu0 0.0
        %540 = vmatpush1.msra.mxu0 0.0
        %541 = vmatprep.subr.mxu0 0.0
        %542 = vmatpush1.msra.mxu0 0.0
        %543 = vmatprep.subr.mxu0 0.0
        %544 = vmatpush1.msra.mxu0 0.0
        %545 = vmatprep.subr.mxu0 0.0
        %546 = vmatpush1.msra.mxu0 0.0
        %547 = vmatprep.subr.mxu0 0.0
        %548 = vmatpush1.msra.mxu0 0.0
        %549 = vmatprep.subr.mxu0 0.0
        %550 = vmatpush1.msra.mxu0 0.0
        %551 = vmatprep.subr.mxu0 0.0
        %552 = vmatpush1.msra.mxu0 0.0
        %553 = vmatprep.subr.mxu0 0.0
        %554 = vmatpush1.msra.mxu0 0.0
        %555 = vmatprep.subr.mxu0 0.0
        %556 = vmatpush1.msra.mxu0 0.0
        %557 = vmatprep.subr.mxu0 0.0
        %558 = vmatpush1.msra.mxu0 0.0
        %559 = vmatprep.subr.mxu0 0.0
        %560 = vmatpush1.msra.mxu0 0.0
        %561 = vmatprep.subr.mxu0 0.0
        %562 = vmatpush1.msra.mxu0 0.0
        %563 = vmatprep.subr.mxu0 0.0
        %564 = vmatpush1.msra.mxu0 0.0
        %565 = vmatprep.subr.mxu0 0.0
        %566 = vmatpush1.msra.mxu0 0.0
        %567 = vmatprep.subr.mxu0 0.0
        %568 = vmatpush1.msra.mxu0 0.0
        %569 = vmatprep.subr.mxu0 0.0
        %570 = vmatpush1.msra.mxu0 0.0
        %571 = vmatprep.subr.mxu0 0.0
        %572 = vmatpush1.msra.mxu0 0.0
        %573 = vmatprep.subr.mxu0 0.0
        %574 = vmatpush1.msra.mxu0 0.0
        %575 = vmatprep.subr.mxu0 0.0
        %576 = vmatpush1.msra.mxu0 0.0
        %577 = vmatprep.subr.mxu0 0.0
        %578 = vmatpush1.msra.mxu0 0.0
        %579 = vmatprep.subr.mxu0 0.0
        %580 = vmatpush1.msra.mxu0 0.0
        %581 = vmatprep.subr.mxu0 0.0
        %582 = vmatpush1.msra.mxu0 0.0
        %583 = vmatprep.subr.mxu0 0.0
        %584 = vmatpush1.msra.mxu0 0.0
        %585 = vmatprep.subr.mxu0 0.0
        %586 = vmatpush1.msra.mxu0 0.0
        %587 = vmatprep.subr.mxu0 0.0
        %588 = vmatpush1.msra.mxu0 0.0
        %589 = vmatprep.subr.mxu0 0.0
        %590 = vmatpush1.msra.mxu0 0.0
        %591 = vmatprep.subr.mxu0 0.0
        %592 = vmatpush1.msra.mxu0 0.0
        %593 = vmatprep.subr.mxu0 0.0
        %594 = vmatpush1.msra.mxu0 0.0
        %595 = vmatprep.subr.mxu0 0.0
        %596 = vmatpush1.msra.mxu0 0.0
        %597 = vmatprep.subr.mxu0 0.0
        %598 = vmatpush1.msra.mxu0 0.0
        %599 = vmatprep.mubr.f32.mxu0 0.0
        %600 = vmatmul.mubr.f32.gmra.mrb[0].mxu0 %v533
        %v601 = vpop.f32.mrb[0].mxu0
        %v602 = vadd.f32 0.0, %v601
        %v603 = vpop.f32.mrb[0].mxu0
        %604 = vdwg.mxu0
        %605 = vrot.lane.b32.xlu0 %v340, 112
        %v606 = vpop.permute.xlu0 %605
        %v609 = vsel %vm348, %v522, 0
        %611 = vmatprep.subr.mxu0 0.0
        %612 = vmatpush1.msra.mxu0 %v606
        %613 = vmatprep.subr.mxu0 0.0
        %614 = vmatpush1.msra.mxu0 0.0
        %615 = vmatprep.subr.mxu0 0.0
        %616 = vmatpush1.msra.mxu0 0.0
        %617 = vmatprep.subr.mxu0 0.0
        %618 = vmatpush1.msra.mxu0 0.0
        %619 = vmatprep.subr.mxu0 0.0
        %620 = vmatpush1.msra.mxu0 0.0
        %621 = vmatprep.subr.mxu0 0.0
        %622 = vmatpush1.msra.mxu0 0.0
        %623 = vmatprep.subr.mxu0 0.0
        %624 = vmatpush1.msra.mxu0 0.0
        %625 = vmatprep.subr.mxu0 0.0
        %626 = vmatpush1.msra.mxu0 0.0
        %627 = vmatprep.subr.mxu0 0.0
        %628 = vmatpush1.msra.mxu0 0.0
        %629 = vmatprep.subr.mxu0 0.0
        %630 = vmatpush1.msra.mxu0 0.0
        %631 = vmatprep.subr.mxu0 0.0
        %632 = vmatpush1.msra.mxu0 0.0
        %633 = vmatprep.subr.mxu0 0.0
        %634 = vmatpush1.msra.mxu0 0.0
        %635 = vmatprep.subr.mxu0 0.0
        %636 = vmatpush1.msra.mxu0 0.0
        %637 = vmatprep.subr.mxu0 0.0
        %638 = vmatpush1.msra.mxu0 0.0
        %639 = vmatprep.subr.mxu0 0.0
        %640 = vmatpush1.msra.mxu0 0.0
        %641 = vmatprep.subr.mxu0 0.0
        %642 = vmatpush1.msra.mxu0 0.0
        %643 = vmatprep.subr.mxu0 0.0
        %644 = vmatpush1.msra.mxu0 0.0
        %645 = vmatprep.subr.mxu0 0.0
        %646 = vmatpush1.msra.mxu0 0.0
        %647 = vmatprep.subr.mxu0 0.0
        %648 = vmatpush1.msra.mxu0 0.0
        %649 = vmatprep.subr.mxu0 0.0
        %650 = vmatpush1.msra.mxu0 0.0
        %651 = vmatprep.subr.mxu0 0.0
        %652 = vmatpush1.msra.mxu0 0.0
        %653 = vmatprep.subr.mxu0 0.0
        %654 = vmatpush1.msra.mxu0 0.0
        %655 = vmatprep.subr.mxu0 0.0
        %656 = vmatpush1.msra.mxu0 0.0
        %657 = vmatprep.subr.mxu0 0.0
        %658 = vmatpush1.msra.mxu0 0.0
        %659 = vmatprep.subr.mxu0 0.0
        %660 = vmatpush1.msra.mxu0 0.0
        %661 = vmatprep.subr.mxu0 0.0
        %662 = vmatpush1.msra.mxu0 0.0
        %663 = vmatprep.subr.mxu0 0.0
        %664 = vmatpush1.msra.mxu0 0.0
        %665 = vmatprep.subr.mxu0 0.0
        %666 = vmatpush1.msra.mxu0 0.0
        %667 = vmatprep.subr.mxu0 0.0
        %668 = vmatpush1.msra.mxu0 0.0
        %669 = vmatprep.subr.mxu0 0.0
        %670 = vmatpush1.msra.mxu0 0.0
        %671 = vmatprep.subr.mxu0 0.0
        %672 = vmatpush1.msra.mxu0 0.0
        %673 = vmatprep.subr.mxu0 0.0
        %674 = vmatpush1.msra.mxu0 0.0
        %675 = vmatprep.mubr.f32.mxu0 0.0
        %676 = vmatmul.mubr.f32.gmra.mrb[0].mxu0 %v609
        %v677 = vpop.f32.mrb[0].mxu0
        %v678 = vadd.f32 0.0, %v677
        %v679 = vpop.f32.mrb[0].mxu0
        %680 = vdwg.mxu0
        %v681 = vrcp.pop %v525
        %v682 = vmul.f32 %v602, %v681
        %v683 = vrcp.pop %v528
        %v684 = vmul.f32 %v678, %v683
        %v685 = vld [vmem:[%s239] sm:$0xff]
        %v687 = vsel %vm348, %v682, 0
        %v690 = vsel %vm348, %v684, 0
        %692 = vmatprep.subr.mxu0 0.0
        %693 = vmatpush1.msra.mxu0 %v685
        %694 = vmatprep.subr.mxu0 0.0
        %695 = vmatpush1.msra.mxu0 0.0
        %696 = vmatprep.subr.mxu0 0.0
        %697 = vmatpush1.msra.mxu0 0.0
        %698 = vmatprep.subr.mxu0 0.0
        %699 = vmatpush1.msra.mxu0 0.0
        %700 = vmatprep.subr.mxu0 0.0
        %701 = vmatpush1.msra.mxu0 0.0
        %702 = vmatprep.subr.mxu0 0.0
        %703 = vmatpush1.msra.mxu0 0.0
        %704 = vmatprep.subr.mxu0 0.0
        %705 = vmatpush1.msra.mxu0 0.0
        %706 = vmatprep.subr.mxu0 0.0
        %707 = vmatpush1.msra.mxu0 0.0
        %708 = vmatprep.subr.mxu0 0.0
        %709 = vmatpush1.msra.mxu0 0.0
        %710 = vmatprep.subr.mxu0 0.0
        %711 = vmatpush1.msra.mxu0 0.0
        %712 = vmatprep.subr.mxu0 0.0
        %713 = vmatpush1.msra.mxu0 0.0
        %714 = vmatprep.subr.mxu0 0.0
        %715 = vmatpush1.msra.mxu0 0.0
        %716 = vmatprep.subr.mxu0 0.0
        %717 = vmatpush1.msra.mxu0 0.0
        %718 = vmatprep.subr.mxu0 0.0
        %719 = vmatpush1.msra.mxu0 0.0
        %720 = vmatprep.subr.mxu0 0.0
        %721 = vmatpush1.msra.mxu0 0.0
        %722 = vmatprep.subr.mxu0 0.0
        %723 = vmatpush1.msra.mxu0 0.0
        %724 = vmatprep.subr.mxu0 0.0
        %725 = vmatpush1.msra.mxu0 0.0
        %726 = vmatprep.subr.mxu0 0.0
        %727 = vmatpush1.msra.mxu0 0.0
        %728 = vmatprep.subr.mxu0 0.0
        %729 = vmatpush1.msra.mxu0 0.0
        %730 = vmatprep.subr.mxu0 0.0
        %731 = vmatpush1.msra.mxu0 0.0
        %732 = vmatprep.subr.mxu0 0.0
        %733 = vmatpush1.msra.mxu0 0.0
        %734 = vmatprep.subr.mxu0 0.0
        %735 = vmatpush1.msra.mxu0 0.0
        %736 = vmatprep.subr.mxu0 0.0
        %737 = vmatpush1.msra.mxu0 0.0
        %738 = vmatprep.subr.mxu0 0.0
        %739 = vmatpush1.msra.mxu0 0.0
        %740 = vmatprep.subr.mxu0 0.0
        %741 = vmatpush1.msra.mxu0 0.0
        %742 = vmatprep.subr.mxu0 0.0
        %743 = vmatpush1.msra.mxu0 0.0
        %744 = vmatprep.subr.mxu0 0.0
        %745 = vmatpush1.msra.mxu0 0.0
        %746 = vmatprep.subr.mxu0 0.0
        %747 = vmatpush1.msra.mxu0 0.0
        %748 = vmatprep.subr.mxu0 0.0
        %749 = vmatpush1.msra.mxu0 0.0
        %750 = vmatprep.subr.mxu0 0.0
        %751 = vmatpush1.msra.mxu0 0.0
        %752 = vmatprep.subr.mxu0 0.0
        %753 = vmatpush1.msra.mxu0 0.0
        %754 = vmatprep.subr.mxu0 0.0
        %755 = vmatpush1.msra.mxu0 0.0
        %756 = vmatprep.mubr.f32.mxu0 0.0
        %757 = vmatmul.mubr.f32.gmra.mrb[0].mxu0 %v687
        %v758 = vpop.f32.mrb[0].mxu0
        %v759 = vadd.f32 0.0, %v758
        %v760 = vpop.f32.mrb[0].mxu0
        %761 = vmatprep.mubr.f32.mxu0 0.0
        %762 = vmatmul.mubr.f32.gmra.mrb[0].mxu0 %v690
        %v763 = vpop.f32.mrb[0].mxu0
        %v764 = vadd.f32 0.0, %v763
        %v765 = vpop.f32.mrb[0].mxu0
        %766 = vdwg.mxu0
        %v767 = vld [vmem:[#allocation2] sm:$0xff]
        %v768 = vld [vmem:[#allocation2 + $0x8] sm:$0xff]
        %v769 = vadd.f32 %v767, %v759
        %v770 = vadd.f32 %v768, %v764
        %771 = vst.msk [vmem:[#allocation2] sm:$0xff] %vm261, %v769
        %772 = vst.msk [vmem:[#allocation2 + $0x8] sm:$0xff] %vm261, %v770
        %p773 = scmp.eq.s32.totalorder %s21, 3
        // Predicated region
        $region41: #{multi_head_attention.1} parent=35 // pred_check
          %p774 = pneg %p773
        $region42: #{multi_head_attention.1} parent=35 // pred_check_branch
          %776 = sbr.rel (%p774) target = $region44
        $region43: #{multi_head_attention.1} parent=35 // pred_region
          %v777 = vld [vmem:[#allocation2] sm:$0xff]
          %v778 = vld [vmem:[#allocation2 + $0x8] sm:$0xff]
          %779 = vst.msk [vmem:[#allocation3] sm:$0xff] %vm261, %v777
          %780 = vst.msk [vmem:[#allocation3 + $0x8] sm:$0xff] %vm261, %v778
        $region44: #{multi_head_attention.1} parent=35 // pred_fallthru
          _
        // Predicated region
        $region45: #{multi_head_attention.1} parent=35 // pred_check
          %p781 = pneg %p145
        $region46: #{multi_head_attention.1} parent=35 // pred_check_branch
          %783 = sbr.rel (%p781) target = $region48
        $region47: #{multi_head_attention.1} parent=35 // pred_region
          %s784 = smul.u32 2, %s20
          %s786 = ssub.s32 256, 256
          %787 = vsyncadd [#allocation4], %s786
          %s788 = smul.addr %s784, 128
          %s789 = scalar_lea.hbm %s4, %s788
          %s790 = sshll.u32 [#allocation3], 4
          %s791 = int_to_ptr.vmem [resolvable:$true] %s790
          %796 = dma.vmem_to_hbm [thread:$0]  %s791, 256, %s789, [#allocation4], 128, 128, 8
        $region48: #{multi_head_attention.1} parent=35 // pred_fallthru
          _
        // Predicated region
        $region49: #{multi_head_attention.1} parent=35 // pred_check
          %p797 = pneg %p145
        $region50: #{multi_head_attention.1} parent=35 // pred_check_branch
          %799 = sbr.rel (%p797) target = $region52
        $region51: #{multi_head_attention.1} parent=35 // pred_region
          %800 = dma.done [#allocation4], 256
        $region52: #{multi_head_attention.1} parent=35 // pred_fallthru
          _
      $region36: #{multi_head_attention.1} parent=5 // pred_fallthru
        _
      %p801 = scmp.le.s32.totalorder 2, %s11
      // Predicated region
      $region53: #{multi_head_attention.1} parent=5 // pred_check
        %p802 = pneg %p801
      $region54: #{multi_head_attention.1} parent=5 // pred_check_branch
        %804 = sbr.rel (%p802) target = $region56
      $region55: #{multi_head_attention.1} parent=5 // pred_region
        %s805 = ssub.s32 %s11, 2
      $region56: #{multi_head_attention.1} parent=5 // pred_fallthru
        _
    $region6: #{multi_head_attention.1} parent=1 // loop_footer
      %s15 = sadd.s32 1, %s11
    $region7: #{multi_head_attention.1} parent=1 // loop_footer_branch
      %10 = sbr.rel target = $region3
    $region8: #{multi_head_attention.1} parent=1 // loop_exit
      _
    %806 = vsyncpa [#allocation4], 1
    %s807 = scalar_lea.sflag [#allocation4], 1
    %808 = vsyncpa %s807, 1

</llo_original>
